<compile_context>
chip_gen: v7x
topology: tpu7x:2x2x1
jax: 0.10.0
libtpu: 0.0.40
codegen_flags: <defaults>
</compile_context>

<pallas_src>
import functools

import jax
import jax.numpy as jnp
from jax.experimental import pallas as pl
from jax.experimental.pallas import tpu as pltpu


def _l1_loss_kernel(logits_ref, target_ref, weight_ref, out_ref, *, batch):
    pid = pl.program_id(0)

    logits = logits_ref[...].astype(jnp.float32)   # (TB, C)
    target = target_ref[...].astype(jnp.float32)   # (TB, C)
    weight = weight_ref[...].astype(jnp.float32)   # (1, C) -> broadcasts over rows

    tb = logits.shape[0]

    # Mask rows past the true batch size (ragged last block) BEFORE the softmax
    # so garbage in padded rows cannot produce inf/nan.
    row_ids = pid * tb + jax.lax.broadcasted_iota(jnp.int32, (tb, 1), 0)
    valid = row_ids < batch                          # (TB, 1) bool
    logits = jnp.where(valid, logits, 0.0)
    target = jnp.where(valid, target, 0.0)

    # Numerically stable softmax over the class axis (dim=1).
    m = jnp.max(logits, axis=1, keepdims=True)
    e = jnp.exp(logits - m)
    denom = jnp.sum(e, axis=1, keepdims=True)
    probs = e * pl.reciprocal(denom, approx=False)   # exact: keep 1e-5 tolerance

    weighted = jnp.abs(probs - target) * weight      # (TB, C)
    per_row = jnp.sum(weighted, axis=1, keepdims=True)   # (TB, 1)
    per_row = jnp.where(valid, per_row, 0.0)
    block_sum = jnp.sum(per_row)                     # scalar partial sum

    # Lane-dense (1,128) output slab per block: partial sum in lane 0, zeros
    # elsewhere.  The wrapper reduces all partials and divides by B.
    lane = jax.lax.broadcasted_iota(jnp.int32, (1, 128), 1)
    out_ref[...] = jnp.where(lane == 0, block_sum, jnp.float32(0.0))


def _physical_vmem_bytes():
    """Best-effort per-core VMEM capacity; falls back to the smallest (v7x)."""
    try:
        info = pltpu.get_tpu_info()
        for attr in ("vmem_capacity_bytes", "vmem_bytes", "vmem_size_bytes"):
            v = getattr(info, attr, None)
            if v:
                return int(v)
    except Exception:
        pass
    return 64 << 20


def l1_loss(logits, target, class_weight, *, max_block_rows=None):
    B, C = logits.shape
    assert target.shape == (B, C)
    weight2d = jnp.asarray(class_weight, dtype=jnp.float32).reshape(1, C)

    # Real element sizes (bf16 pass-through halves HBM traffic); lane padding
    # to 128 for the VMEM footprint.
    isz = jnp.dtype(logits.dtype).itemsize + jnp.dtype(target.dtype).itemsize
    c_pad = pl.cdiv(C, 128) * 128

    # Generation-aware budgets.
    phys_vmem = _physical_vmem_bytes()
    if phys_vmem >= (96 << 20):          # v5e / v6e: 128 MiB physical VMEM
        stream_budget = 48 << 20         # total bytes: 2 inputs x 2 buffers
        vmem_cap = 96 << 20
    else:                                # v7x (64 MiB per TC) or unknown
        stream_budget = 20 << 20
        vmem_cap = 48 << 20

    # Byte-targeted row tile: fill the stream budget with the two
    # double-buffered, lane-padded input tiles.
    tb = stream_budget // (2 * c_pad * isz)
    if max_block_rows is not None:
        tb = min(tb, max_block_rows)
    tb = max(8, (tb // 8) * 8)           # row tile multiple of 8 ...
    if B <= tb:
        tb = B                           # ... or the full batch extent.
    num_blocks = pl.cdiv(B, tb)

    # Padding-aware VMEM accounting: double-buffered inputs + weight + output.
    vmem_needed = (2 * tb * c_pad * isz          # logits + target, 2 buffers
                   + 2 * 8 * c_pad * 4           # weight (sublane/lane padded)
                   + 2 * 8 * 128 * 4)            # output slab
    vmem_limit = int(min(max(int(vmem_needed * 1.2) + (1 << 20), 4 << 20),
                         vmem_cap))

    kernel = functools.partial(_l1_loss_kernel, batch=B)

    out = pl.pallas_call(
        kernel,
        out_shape=jax.ShapeDtypeStruct((1, num_blocks * 128), jnp.float32),
        grid_spec=pltpu.PrefetchScalarGridSpec(
            num_scalar_prefetch=0,
            grid=(num_blocks,),
            in_specs=[
                pl.BlockSpec((tb, C), lambda i: (i, 0)),
                pl.BlockSpec((tb, C), lambda i: (i, 0)),
                pl.BlockSpec((1, C), lambda i: (0, 0)),   # reused every step
            ],
            out_specs=pl.BlockSpec((1, 128), lambda i: (0, i)),
        ),
        compiler_params=pltpu.CompilerParams(
            dimension_semantics=("parallel",),   # disjoint per-block partials
            vmem_limit_bytes=vmem_limit,
        ),
        cost_estimate=pl.CostEstimate(
            flops=7 * B * C,
            transcendentals=B * C,
            bytes_accessed=B * C * isz + C * 4 + num_blocks * 128 * 4,
        ),
    )(logits, target, weight2d)

    # mean over batch = sum of per-block partial sums / B.
    return jnp.sum(out, dtype=jnp.float32) / jnp.float32(B)


def l1_loss_ref(logits, target, class_weight):
    probs = jax.nn.softmax(logits.astype(jnp.float32), axis=1)
    diff = jnp.abs(probs - target.astype(jnp.float32))
    w = jnp.broadcast_to(jnp.asarray(class_weight, jnp.float32).reshape(1, -1),
                         diff.shape)
    return jnp.mean(jnp.sum(diff * w, axis=1))


if __name__ == "__main__":
    key = jax.random.PRNGKey(0)

    # --- Primary (module-sized) test: B=8, C=32 ------------------------------
    B, C = 8, 32
    k1, k2, k3, k4 = jax.random.split(key, 4)
    logits = jax.random.normal(k1, (B, C), dtype=jnp.float32)
    target = jax.nn.softmax(jax.random.normal(k2, (B, C), dtype=jnp.float32), axis=1)
    class_weight = 0.5 + jnp.arange(C, dtype=jnp.float32) / C

    out = jax.block_until_ready(l1_loss(logits, target, class_weight))
    ref = l1_loss_ref(logits, target, class_weight)
    assert jnp.allclose(out, ref, rtol=1e-5, atol=1e-5), (out, ref)

    # --- Multi-block grid + ragged last block: B=300 with 128-row tiles ------
    B2, C2 = 300, 32
    logits2 = jax.random.normal(k3, (B2, C2), dtype=jnp.float32)
    target2 = jax.nn.softmax(jax.random.normal(k4, (B2, C2), dtype=jnp.float32), axis=1)
    class_weight2 = 0.5 + jnp.arange(C2, dtype=jnp.float32) / C2

    out2 = jax.block_until_ready(
        l1_loss(logits2, target2, class_weight2, max_block_rows=128)
    )
    ref2 = l1_loss_ref(logits2, target2, class_weight2)
    assert jnp.allclose(out2, ref2, rtol=1e-5, atol=1e-5), (out2, ref2)

    print("KERNEL_OK")
</pallas_src>

<mosaic_0001>
module attributes {stable_mosaic.version = 11 : i64} {
  func.func @_l1_loss_kernel(%arg0: i32, %arg1: memref<8x32xf32, #tpu.memory_space<vmem>>, %arg2: memref<8x32xf32, #tpu.memory_space<vmem>>, %arg3: memref<1x32xf32, #tpu.memory_space<vmem>>, %arg4: memref<1x128xf32, #tpu.memory_space<vmem>>) attributes {dimension_semantics = [#tpu.dimension_semantics<parallel>], iteration_bounds = array<i64: 1>, scalar_prefetch = 0 : i64, scratch_operands = 0 : i64, tpu.core_type = #tpu.core_type<tc>, window_params = [{transform_indices = @transform_0, window_bounds = array<i64: 8, 32>}, {transform_indices = @transform_1, window_bounds = array<i64: 8, 32>}, {pipeline_mode = #tpu.pipeline_mode<synchronous>, transform_indices = @transform_2, window_bounds = array<i64: 1, 32>}, {transform_indices = @transform_3, window_bounds = array<i64: 1, 128>}]} {
    %c0 = arith.constant 0 : index
    %c0_0 = arith.constant 0 : index
    %0 = vector.load %arg1[%c0, %c0_0] : memref<8x32xf32, #tpu.memory_space<vmem>>, vector<8x32xf32>
    %c0_1 = arith.constant 0 : index
    %c0_2 = arith.constant 0 : index
    %1 = vector.load %arg2[%c0_1, %c0_2] : memref<8x32xf32, #tpu.memory_space<vmem>>, vector<8x32xf32>
    %c0_3 = arith.constant 0 : index
    %c0_4 = arith.constant 0 : index
    %2 = vector.load %arg3[%c0_3, %c0_4] : memref<1x32xf32, #tpu.memory_space<vmem>>, vector<1x32xf32>
    %c8_i32 = arith.constant 8 : i32
    %3 = arith.muli %arg0, %c8_i32 : i32
    %4 = tpu.iota {dimensions = array<i32: 0>} : vector<8x1xi32>
    %5 = vector.broadcast %3 : i32 to vector<8x1xi32>
    %6 = arith.addi %5, %4 : vector<8x1xi32>
    %c8_i32_5 = arith.constant 8 : i32
    %7 = vector.broadcast %c8_i32_5 : i32 to vector<8x1xi32>
    %8 = arith.cmpi slt, %6, %7 : vector<8x1xi32>
    %cst = arith.constant 0.000000e+00 : f32
    %9 = vector.shape_cast %8 : vector<8x1xi1> to vector<8x1xi1>
    %10 = vector.broadcast %9 : vector<8x1xi1> to vector<8x32xi1>
    %11 = vector.broadcast %cst : f32 to vector<8x32xf32>
    %12 = arith.select %10, %0, %11 : vector<8x32xi1>, vector<8x32xf32>
    %cst_6 = arith.constant 0.000000e+00 : f32
    %13 = vector.shape_cast %8 : vector<8x1xi1> to vector<8x1xi1>
    %14 = vector.broadcast %13 : vector<8x1xi1> to vector<8x32xi1>
    %15 = vector.broadcast %cst_6 : f32 to vector<8x32xf32>
    %16 = arith.select %14, %1, %15 : vector<8x32xi1>, vector<8x32xf32>
    %cst_7 = arith.constant dense<0xFF800000> : vector<8xf32>
    %17 = vector.multi_reduction <maximumf>, %12, %cst_7 [1] : vector<8x32xf32> to vector<8xf32>
    %18 = vector.shape_cast %17 : vector<8xf32> to vector<8x1xf32>
    %19 = vector.broadcast %18 : vector<8x1xf32> to vector<8x32xf32>
    %20 = arith.subf %12, %19 : vector<8x32xf32>
    %21 = math.exp %20 : vector<8x32xf32>
    %cst_8 = arith.constant dense<0.000000e+00> : vector<8xf32>
    %22 = vector.multi_reduction <add>, %21, %cst_8 [1] : vector<8x32xf32> to vector<8xf32>
    %23 = vector.shape_cast %22 : vector<8xf32> to vector<8x1xf32>
    %24 = tpu.reciprocal %23 : vector<8x1xf32> -> vector<8x1xf32>
    %25 = vector.broadcast %24 : vector<8x1xf32> to vector<8x32xf32>
    %26 = arith.mulf %21, %25 : vector<8x32xf32>
    %27 = arith.subf %26, %16 : vector<8x32xf32>
    %28 = math.absf %27 : vector<8x32xf32>
    %29 = vector.broadcast %2 : vector<1x32xf32> to vector<8x32xf32>
    %30 = arith.mulf %28, %29 : vector<8x32xf32>
    %cst_9 = arith.constant dense<0.000000e+00> : vector<8xf32>
    %31 = vector.multi_reduction <add>, %30, %cst_9 [1] : vector<8x32xf32> to vector<8xf32>
    %32 = vector.shape_cast %31 : vector<8xf32> to vector<8x1xf32>
    %cst_10 = arith.constant 0.000000e+00 : f32
    %33 = vector.broadcast %cst_10 : f32 to vector<8x1xf32>
    %34 = arith.select %8, %32, %33 : vector<8x1xi1>, vector<8x1xf32>
    %35 = vector.shape_cast %34 : vector<8x1xf32> to vector<1x8x1xf32>
    %cst_11 = arith.constant dense<0.000000e+00> : vector<1xf32>
    %36 = vector.multi_reduction <add>, %35, %cst_11 [1, 2] : vector<1x8x1xf32> to vector<1xf32>
    %37 = vector.shape_cast %36 : vector<1xf32> to vector<1x1x1xf32>
    %38 = vector.extract %37[0, 0, 0] : f32 from vector<1x1x1xf32>
    %39 = tpu.iota {dimensions = array<i32: 1>} : vector<1x128xi32>
    %c0_i32 = arith.constant 0 : i32
    %40 = vector.broadcast %c0_i32 : i32 to vector<1x128xi32>
    %41 = arith.cmpi eq, %39, %40 : vector<1x128xi32>
    %cst_12 = arith.constant 0.000000e+00 : f32
    %42 = vector.broadcast %38 : f32 to vector<1x128xf32>
    %43 = vector.broadcast %cst_12 : f32 to vector<1x128xf32>
    %44 = arith.select %41, %42, %43 : vector<1x128xi1>, vector<1x128xf32>
    %c0_13 = arith.constant 0 : index
    %c0_14 = arith.constant 0 : index
    %45 = vector.load %arg4[%c0_13, %c0_14] : memref<1x128xf32, #tpu.memory_space<vmem>>, vector<1x128xf32>
    tpu.vector_store %arg4[%c0_13, %c0_14], %44 {strides = array<i32>} : memref<1x128xf32, #tpu.memory_space<vmem>>, vector<1x128xf32>,
    return
  }
  func.func @transform_0(%arg0: i32) -> (i32, i32) {
    %c0_i32 = arith.constant 0 : i32
    %c0_i32_0 = arith.constant 0 : i32
    return %arg0, %c0_i32 : i32, i32
  }
  func.func @transform_1(%arg0: i32) -> (i32, i32) {
    %c0_i32 = arith.constant 0 : i32
    %c0_i32_0 = arith.constant 0 : i32
    return %arg0, %c0_i32 : i32, i32
  }
  func.func @transform_2(%arg0: i32) -> (i32, i32) {
    %c0_i32 = arith.constant 0 : i32
    %c0_i32_0 = arith.constant 0 : i32
    %c0_i32_1 = arith.constant 0 : i32
    return %c0_i32, %c0_i32_0 : i32, i32
  }
  func.func @transform_3(%arg0: i32) -> (i32, i32) {
    %c0_i32 = arith.constant 0 : i32
    %c0_i32_0 = arith.constant 0 : i32
    return %c0_i32, %arg0 : i32, i32
  }
}

</mosaic_0001>

<llo_original>
// kernel: tpu_custom_call.1
$region0: #{tpu_custom_call.1}
  #allocation0 [shape = 'u32[]', space=smem, size = 0x4, offset = 0x4, fixed_abs, tag = 'smem constant byte address 0x4 - core index']
  #allocation1 [shape = 'u32[144,128]{1,0:T(1,128)}', space=vmem, size = 0x12000, scoped, tag = 'internal scratch']
  %s0 = inlined_call_operand.hbm [shape: f32[8,32], index: 0, kind: input, shape index: {}]
  %s1 = inlined_call_operand.hbm [shape: f32[8,32], index: 1, kind: input, shape index: {}]
  %s2 = inlined_call_operand.vmem [shape: f32[1,32], index: 2, kind: input, shape index: {}]
  %s3 = inlined_call_operand.hbm [shape: f32[1,128], index: 3, kind: output, shape index: {}]
  %s4 = sld [smem:[#allocation0]]
  $region30: #{tpu_custom_call.1} parent=0
    _
  %s6 = ssub.s32 1, %s4
  %s7 = scalar_select 0, %s6, %s4
  $region1: #{tpu_custom_call.1} parent=0
    #allocation2 [shape = 'u8[4096]{0}', space=vmem, size = 0x1000, scoped, tag = 'input window, operand 0, single buffered']
    #allocation3 [shape = 's32[1]{0}', space=sflag, size = 0x4, scoped, tag = 'scoped memory for tpu_custom_call.1']
    #allocation4 [shape = 's32[1]{0}', space=sflag, size = 0x4, scoped, tag = 'scoped memory for tpu_custom_call.1']
    #allocation5 [shape = 'u8[4096]{0}', space=vmem, size = 0x1000, scoped, tag = 'input window, operand 1, single buffered']
    #allocation6 [shape = 's32[1]{0}', space=sflag, size = 0x4, scoped, tag = 'scoped memory for tpu_custom_call.1']
    #allocation7 [shape = 'u8[512]{0}', space=vmem, size = 0x400, scoped, tag = 'output window, operand 0, single buffered']
    %8 = vsyncpa [#allocation3], 0
    %9 = vsyncpa [#allocation6], 0
    %10 = vsyncpa [#allocation4], 0
    // Predicated region
    $region2: #{tpu_custom_call.1} parent=1 // pred_check
      _
    $region3: #{tpu_custom_call.1} parent=1 // pred_check_branch
      %12 = sbr.rel (0) target = $region5
    $region4: #{tpu_custom_call.1} parent=1 // pred_region
      %s14 = ssub.s32 128, 128
      %15 = vsyncadd [#allocation3], %s14
      %s17 = sshll.u32 [#allocation2], 4
      %s18 = int_to_ptr.vmem [resolvable:$true] %s17
      %20 = dma.hbm_to_vmem [thread:$0]  %s0, 128, %s18, [#allocation3]
    $region5: #{tpu_custom_call.1} parent=1 // pred_fallthru
      _
    // Predicated region
    $region6: #{tpu_custom_call.1} parent=1 // pred_check
      _
    $region7: #{tpu_custom_call.1} parent=1 // pred_check_branch
      %22 = sbr.rel (0) target = $region9
    $region8: #{tpu_custom_call.1} parent=1 // pred_region
      %s24 = ssub.s32 128, 128
      %25 = vsyncadd [#allocation6], %s24
      %s27 = sshll.u32 [#allocation5], 4
      %s28 = int_to_ptr.vmem [resolvable:$true] %s27
      %30 = dma.hbm_to_vmem [thread:$0]  %s1, 128, %s28, [#allocation6]
    $region9: #{tpu_custom_call.1} parent=1 // pred_fallthru
      _
    // Predicated region
    $region10: #{tpu_custom_call.1} parent=1 // pred_check
      _
    $region11: #{tpu_custom_call.1} parent=1 // pred_check_branch
      %32 = sbr.rel (0) target = $region13
    $region12: #{tpu_custom_call.1} parent=1 // pred_region
      _
    $region13: #{tpu_custom_call.1} parent=1 // pred_fallthru
      _
    // Predicated region
    $region14: #{tpu_custom_call.1} parent=1 // pred_check
      _
    $region15: #{tpu_custom_call.1} parent=1 // pred_check_branch
      %34 = sbr.rel (0) target = $region17
    $region16: #{tpu_custom_call.1} parent=1 // pred_region
      %35 = dma.done [#allocation3], 128
    $region17: #{tpu_custom_call.1} parent=1 // pred_fallthru
      _
    // Predicated region
    $region18: #{tpu_custom_call.1} parent=1 // pred_check
      _
    $region19: #{tpu_custom_call.1} parent=1 // pred_check_branch
      %37 = sbr.rel (0) target = $region21
    $region20: #{tpu_custom_call.1} parent=1 // pred_region
      %38 = dma.done [#allocation6], 128
    $region21: #{tpu_custom_call.1} parent=1 // pred_fallthru
      _
    %v39 = vld [vmem:[#allocation2] sm:$0xff]
    %v40 = vld [vmem:[#allocation5] sm:$0xff]
    %v41 = vld [vmem:[%s2] sm:$0x1]
    %s42 = smul.u32 0, 8
    %v43 = vlaneseq
    %v44 = vshrl.u32 %v43, 7
    %v45 = vstv %s42
    %v46 = vadd.s32 %v45, %v44
    %vm47 = vcmp.lt.s32.totalorder %v46, 8
    %v48 = vsel %vm47, 1, 0
    %vm49 = vcmp.eq.s32.totalorder %v48, 1
    %v50 = vsel %vm49, %v39, 0.0
    %v51 = vsel %vm49, %v40, 0.0
    %vm52 = vcmask 261120
    %v53 = vsel %vm52, %v50, -inf
    %54 = vmax.xlane.f32.xlu0 %v53
    %v55 = vpop.xlane.xlu0 %54
    %v56 = vsub.f32 %v50, %v55
    %v57 = vmul.f32 %v56, 1.442695
    %v58 = vpow.pop %v57
    %v59 = vsel %vm52, %v58, 0.0
    %60 = vadd.xlane.f32.xlu0 %v59
    %v61 = vpop.xlane.xlu0 %60
    %v62 = vrcp.pop %v61
    %v63 = vmul.f32 %v58, %v62
    %v64 = vsub.f32 %v63, %v51
    %v65 = vand.u32 2147483647, %v64
    %v67 = vlaneseq
    %v68 = vshrl.u32 %v67, 7
    %v69 = vsub.s32 0, %v68
    %v70 = vrot.slane %v41, %v69
    %v72 = vmul.f32 %v65, %v70
    %v73 = vsel %vm52, %v72, 0.0
    %74 = vadd.xlane.f32.xlu0 %v73
    %v75 = vpop.xlane.xlu0 %74
    %v76 = vsel %vm47, %v75, 0.0
    %vm77 = vcmask 7168
    %v78 = vsel %vm77, %v76, 0.0
    %79 = vadd.xlane.f32.xlu0 %v78
    %v80 = vpop.xlane.xlu0 %79
    %v81 = vrot.slane %v80, 4
    %v82 = vadd.f32 %v80, %v81
    %v83 = vrot.slane %v82, 2
    %v84 = vadd.f32 %v82, %v83
    %v85 = vrot.slane %v84, 1
    %v86 = vadd.f32 %v84, %v85
    %s87 = vtos %v86
    %v88 = vlaneseq
    %v89 = vand.u32 %v88, 127
    %vm90 = vcmp.eq.s32.totalorder %v89, 0
    %v91 = vstv %s87
    %v92 = vsel %vm90, %v91, 0.0
    %93 = vst [vmem:[#allocation7] sm:$0x1] %v92
    // Predicated region
    $region22: #{tpu_custom_call.1} parent=1 // pred_check
      _
    $region23: #{tpu_custom_call.1} parent=1 // pred_check_branch
      %95 = sbr.rel (0) target = $region25
    $region24: #{tpu_custom_call.1} parent=1 // pred_region
      %s97 = ssub.s32 16, 16
      %98 = vsyncadd [#allocation4], %s97
      %s100 = sshll.u32 [#allocation7], 4
      %s101 = int_to_ptr.vmem [resolvable:$true] %s100
      %103 = dma.vmem_to_hbm [thread:$0]  %s101, 16, %s3, [#allocation4]
    $region25: #{tpu_custom_call.1} parent=1 // pred_fallthru
      _
    // Predicated region
    $region26: #{tpu_custom_call.1} parent=1 // pred_check
      _
    $region27: #{tpu_custom_call.1} parent=1 // pred_check_branch
      %105 = sbr.rel (0) target = $region29
    $region28: #{tpu_custom_call.1} parent=1 // pred_region
      %106 = dma.done [#allocation4], 16
    $region29: #{tpu_custom_call.1} parent=1 // pred_fallthru
      _
    %107 = vsyncpa [#allocation3], 1
    %108 = vsyncpa [#allocation6], 1
    %109 = vsyncpa [#allocation4], 1

</llo_original>
